<compile_context>
chip_gen: v5e
topology: v5e:2x2
jax: 0.10.0
libtpu: 0.0.40
codegen_flags: <defaults>
</compile_context>

<pallas_src>
import functools

import jax
import jax.numpy as jnp
from jax.experimental import pallas as pl
from jax.experimental.pallas import tpu as pltpu

_LANES = 128
_SUBLANES = 8
_ALIGN = _SUBLANES * _LANES  # 1024 elements


def _tile_config():
    """Per-TPU-generation (tile_rows, vmem_limit_bytes) for the streaming reduction."""
    try:
        kind = jax.devices()[0].device_kind.lower()
    except Exception:  # pragma: no cover - defensive
        kind = ""
    if "v5 lite" in kind or "v5lite" in kind or "v5e" in kind:
        # v5e: 820 GB/s HBM, 128 MiB physical VMEM but 16 MiB default scoped limit.
        # 4096-row f32 tiles (2 MiB/input/step) + an explicitly raised limit leave
        # headroom for the f32 elementwise intermediates.
        return 4096, 64 << 20
    if "v6" in kind:
        # v6e: ~1.4 TB/s, 128 MiB physical VMEM -> big tiles amortize step overhead.
        return 8192, 96 << 20
    if "v7" in kind or "7x" in kind:
        # v7x: ~3.2 TB/s but only 64 MiB VMEM per TC.  4096-row tiles (8 MiB of
        # double-buffered inputs) + 48 MiB scoped limit keep 2x headroom for the
        # f32 intermediates while cutting per-step overhead to ~20%.
        return 4096, 48 << 20
    # Unknown generation (v4/v5p/interpret/...): conservative defaults.
    return 2048, None


def _bce_partial_kernel(x_ref, t_ref, o_ref, *, tile_rows, total_rows, binary_targets):
    """Per-block partial sum of binary cross entropy, reduced to an (8, 128) tile."""
    x = x_ref[...].astype(jnp.float32)
    t = t_ref[...].astype(jnp.float32)

    # PyTorch F.binary_cross_entropy clamps each log term at -100.
    log_x = jnp.maximum(jnp.log(x), -100.0)
    log_1mx = jnp.maximum(jnp.log1p(-x), -100.0)

    if binary_targets:
        # Static fast path for known-0/1 targets: one transcendental-consuming term.
        bce = -jnp.where(t >= 0.5, log_x, log_1mx)
    else:
        # Two-term form kept so soft (non-binary) targets remain exact.
        bce = -(t * log_x + (1.0 - t) * log_1mx)

    def _partial(v):
        # (tile_rows, 128) -> (8, 128): layout-preserving reshape + elementwise vreg
        # adds (pure VPU; no per-step cross-lane XLU reduce, no scalar RMW).
        return jnp.sum(v.reshape(tile_rows // _SUBLANES, _SUBLANES, _LANES), axis=0)

    if total_rows % tile_rows == 0:
        # Evenly tiled: every block takes the unmasked path (no iota/compare at all).
        o_ref[...] = _partial(bce)
    else:
        last = pl.num_programs(0) - 1

        @pl.when(pl.program_id(0) != last)
        def _():
            o_ref[...] = _partial(bce)

        @pl.when(pl.program_id(0) == last)
        def _():
            # Only the ragged final block pays for the mask.  jnp.where (select)
            # semantics are required here: out-of-window garbage may be NaN/-inf
            # after the logs and must be discarded, not multiplied.
            row0 = pl.program_id(0) * tile_rows
            row = row0 + jax.lax.broadcasted_iota(jnp.int32, (tile_rows, _LANES), 0)
            o_ref[...] = _partial(jnp.where(row < total_rows, bce, 0.0))


def _bce_partial_sums(x2d, t2d, tile_rows, vmem_limit_bytes, binary_targets):
    rows, cols = x2d.shape
    assert cols == _LANES and rows % _SUBLANES == 0 and tile_rows % _SUBLANES == 0
    nblocks = pl.cdiv(rows, tile_rows)

    kernel = functools.partial(
        _bce_partial_kernel,
        tile_rows=tile_rows,
        total_rows=rows,
        binary_targets=binary_targets,
    )

    compiler_kwargs = dict(
        # Independent partial sums -> fully parallel grid (uses both TCs on v7x).
        dimension_semantics=("parallel",),
    )
    if vmem_limit_bytes is not None:
        compiler_kwargs["vmem_limit_bytes"] = vmem_limit_bytes

    return pl.pallas_call(
        kernel,
        out_shape=jax.ShapeDtypeStruct((nblocks * _SUBLANES, _LANES), jnp.float32),
        grid_spec=pltpu.PrefetchScalarGridSpec(
            num_scalar_prefetch=0,
            grid=(nblocks,),
            in_specs=[
                pl.BlockSpec((tile_rows, _LANES), lambda i: (i, 0)),
                pl.BlockSpec((tile_rows, _LANES), lambda i: (i, 0)),
            ],
            out_specs=pl.BlockSpec((_SUBLANES, _LANES), lambda i: (i, 0)),
        ),
        compiler_params=pltpu.CompilerParams(**compiler_kwargs),
    )(x2d, t2d)


@functools.partial(
    jax.jit, static_argnames=("alpha", "gamma", "reduce", "binary_targets")
)
def focal_loss(inputs, targets, alpha=1.0, gamma=2.0, reduce=True, binary_targets=False):
    """JAX/Pallas equivalent of FocalLoss.forward (logits=False path).

    Inputs/targets may be any float (or integer-for-targets) dtype; the cast to f32
    happens inside the kernel, so passing bf16 halves HBM traffic.
    """
    n = inputs.size
    x = inputs.reshape(-1)  # metadata-only for contiguous inputs
    t = targets.reshape(-1)

    n_main = (n // _ALIGN) * _ALIGN  # largest (8*128)-aligned prefix (static)

    bce_sum = jnp.float32(0.0)

    if n_main > 0:
        if n_main == n:
            x_main, t_main = x, t            # zero-copy path (no slice, no pad)
        else:
            x_main, t_main = x[:n_main], t[:n_main]
        rows = n_main // _LANES
        x2d = x_main.reshape(rows, _LANES)
        t2d = t_main.reshape(rows, _LANES)

        tile_rows, vmem_limit = _tile_config()
        tile_rows = min(tile_rows, rows)

        partials = _bce_partial_sums(x2d, t2d, tile_rows, vmem_limit, binary_targets)
        bce_sum = bce_sum + jnp.sum(partials)  # tiny final reduce

    if n_main != n:
        # <=1023-element ragged tail: plain-JAX sum, negligible HBM traffic.  This
        # replaces the old whole-tensor concatenate-pad copy.
        xt = x[n_main:].astype(jnp.float32)
        tt = t[n_main:].astype(jnp.float32)
        log_x = jnp.maximum(jnp.log(xt), -100.0)
        log_1mx = jnp.maximum(jnp.log1p(-xt), -100.0)
        bce_sum = bce_sum + jnp.sum(-(tt * log_x + (1.0 - tt) * log_1mx))

    bce_mean = bce_sum / jnp.float32(n)  # F.binary_cross_entropy default 'mean'

    pt = jnp.exp(-bce_mean)
    f_loss = jnp.float32(alpha) * (1.0 - pt) ** jnp.float32(gamma) * bce_mean
    # reduce=True -> mean of a scalar is the scalar; reduce=False returns the same scalar.
    return f_loss


def _reference(inputs, targets, alpha=1.0, gamma=2.0):
    x = inputs.astype(jnp.float32)
    t = targets.astype(jnp.float32)
    log_x = jnp.maximum(jnp.log(x), -100.0)
    log_1mx = jnp.maximum(jnp.log1p(-x), -100.0)
    bce = jnp.mean(-(t * log_x + (1.0 - t) * log_1mx))
    pt = jnp.exp(-bce)
    return alpha * (1.0 - pt) ** gamma * bce


if __name__ == "__main__":
    key = jax.random.PRNGKey(0)
    k1, k2 = jax.random.split(key)
    # Small NCHW-shaped probability maps and binary targets.
    B, C, H, W = 2, 4, 16, 16
    inputs = jax.random.uniform(k1, (B, C, H, W), jnp.float32, 1e-4, 1.0 - 1e-4)
    targets = (jax.random.uniform(k2, (B, C, H, W)) > 0.5).astype(jnp.float32)

    out = focal_loss(inputs, targets, alpha=1.0, gamma=2.0, reduce=True)
    out = jax.block_until_ready(out)

    ref = _reference(inputs, targets)
    assert jnp.allclose(out, ref, rtol=1e-5, atol=1e-6), (out, ref)
    print("KERNEL_OK")
</pallas_src>

<mosaic_0001>
module attributes {stable_mosaic.version = 11 : i64} {
  func.func @_bce_partial_kernel(%arg0: i32, %arg1: memref<16x128xf32, #tpu.memory_space<vmem>>, %arg2: memref<16x128xf32, #tpu.memory_space<vmem>>, %arg3: memref<8x128xf32, #tpu.memory_space<vmem>>) attributes {dimension_semantics = [#tpu.dimension_semantics<parallel>], iteration_bounds = array<i64: 1>, scalar_prefetch = 0 : i64, scratch_operands = 0 : i64, tpu.core_type = #tpu.core_type<tc>, window_params = [{transform_indices = @transform_0, window_bounds = array<i64: 16, 128>}, {transform_indices = @transform_1, window_bounds = array<i64: 16, 128>}, {transform_indices = @transform_2, window_bounds = array<i64: 8, 128>}]} {
    %c0 = arith.constant 0 : index
    %c0_0 = arith.constant 0 : index
    %0 = vector.load %arg1[%c0, %c0_0] : memref<16x128xf32, #tpu.memory_space<vmem>>, vector<16x128xf32>
    %c0_1 = arith.constant 0 : index
    %c0_2 = arith.constant 0 : index
    %1 = vector.load %arg2[%c0_1, %c0_2] : memref<16x128xf32, #tpu.memory_space<vmem>>, vector<16x128xf32>
    %2 = math.log %0 : vector<16x128xf32>
    %cst = arith.constant -1.000000e+02 : f32
    %3 = vector.broadcast %cst : f32 to vector<16x128xf32>
    %4 = arith.maximumf %2, %3 : vector<16x128xf32>
    %cst_3 = arith.constant 0.000000e+00 : f32
    %5 = vector.broadcast %cst_3 : f32 to vector<16x128xf32>
    %6 = arith.subf %5, %0 : vector<16x128xf32>
    %7 = math.log1p %6 : vector<16x128xf32>
    %cst_4 = arith.constant -1.000000e+02 : f32
    %8 = vector.broadcast %cst_4 : f32 to vector<16x128xf32>
    %9 = arith.maximumf %7, %8 : vector<16x128xf32>
    %10 = arith.mulf %1, %4 : vector<16x128xf32>
    %cst_5 = arith.constant 1.000000e+00 : f32
    %11 = vector.broadcast %cst_5 : f32 to vector<16x128xf32>
    %12 = arith.subf %11, %1 : vector<16x128xf32>
    %13 = arith.mulf %12, %9 : vector<16x128xf32>
    %14 = arith.addf %10, %13 : vector<16x128xf32>
    %cst_6 = arith.constant 0.000000e+00 : f32
    %15 = vector.broadcast %cst_6 : f32 to vector<16x128xf32>
    %16 = arith.subf %15, %14 : vector<16x128xf32>
    %17 = vector.shape_cast %16 : vector<16x128xf32> to vector<2x8x128xf32>
    %cst_7 = arith.constant dense<0.000000e+00> : vector<8x128xf32>
    %18 = vector.multi_reduction <add>, %17, %cst_7 [0] : vector<2x8x128xf32> to vector<8x128xf32>
    %c0_8 = arith.constant 0 : index
    %c0_9 = arith.constant 0 : index
    %19 = vector.load %arg3[%c0_8, %c0_9] : memref<8x128xf32, #tpu.memory_space<vmem>>, vector<8x128xf32>
    tpu.vector_store %arg3[%c0_8, %c0_9], %18 {strides = array<i32>} : memref<8x128xf32, #tpu.memory_space<vmem>>, vector<8x128xf32>,
    return
  }
  func.func @transform_0(%arg0: i32) -> (i32, i32) {
    %c0_i32 = arith.constant 0 : i32
    %c0_i32_0 = arith.constant 0 : i32
    return %arg0, %c0_i32 : i32, i32
  }
  func.func @transform_1(%arg0: i32) -> (i32, i32) {
    %c0_i32 = arith.constant 0 : i32
    %c0_i32_0 = arith.constant 0 : i32
    return %arg0, %c0_i32 : i32, i32
  }
  func.func @transform_2(%arg0: i32) -> (i32, i32) {
    %c0_i32 = arith.constant 0 : i32
    %c0_i32_0 = arith.constant 0 : i32
    return %arg0, %c0_i32 : i32, i32
  }
}

</mosaic_0001>

<llo_original>
// kernel: focal_loss.1
$region0: #{focal_loss.1}
  #allocation0 [shape = 'u32[]', space=smem, size = 0x4, offset = 0x4, fixed_abs, tag = 'smem constant byte address 0x4 - core index']
  #allocation1 [shape = 'u32[72,128]{1,0:T(1,128)}', space=vmem, size = 0x9000, scoped, tag = 'internal scratch']
  %s0 = inlined_call_operand.vmem [shape: f32[16,128], index: 0, kind: input, shape index: {}]
  %s1 = inlined_call_operand.vmem [shape: f32[16,128], index: 1, kind: input, shape index: {}]
  %s2 = inlined_call_operand.vmem [shape: f32[8,128], index: 2, kind: output, shape index: {}]
  %s3 = sld [smem:[#allocation0]]
  $region18: #{focal_loss.1} parent=0
    _
  %s5 = ssub.s32 1, %s3
  %s6 = scalar_select 0, %s5, %s3
  // Predicated region
  $region2: #{focal_loss.1} parent=0 // pred_check
    _
  $region3: #{focal_loss.1} parent=0 // pred_check_branch
    %8 = sbr.rel (0) target = $region5
  $region4: #{focal_loss.1} parent=0 // pred_region
    _
  $region5: #{focal_loss.1} parent=0 // pred_fallthru
    _
  // Predicated region
  $region6: #{focal_loss.1} parent=0 // pred_check
    _
  $region7: #{focal_loss.1} parent=0 // pred_check_branch
    %10 = sbr.rel (0) target = $region9
  $region8: #{focal_loss.1} parent=0 // pred_region
    _
  $region9: #{focal_loss.1} parent=0 // pred_fallthru
    _
  %v11 = vld [vmem:[%s0] sm:$0xff]
  %v12 = vld [vmem:[%s0 + $0x8] sm:$0xff]
  %v13 = vld [vmem:[%s1] sm:$0xff]
  %v14 = vld [vmem:[%s1 + $0x8] sm:$0xff]
  %v15 = vlog2.pop %v11
  %v16 = vmul.f32 %v15, 0.6931472
  %v17 = vlog2.pop %v12
  %v18 = vmul.f32 %v17, 0.6931472
  %v19 = vmax.f32 %v16, -100.0
  %v20 = vmax.f32 %v18, -100.0
  %v21 = vsub.f32 0.0, %v11
  %v22 = vsub.f32 0.0, %v12
  %v23 = vadd.f32 %v21, 1.0
  %v24 = vlog2.pop %v23
  %v25 = vmul.f32 %v24, 0.6931472
  %v26 = vmul.f32 -0.5, %v21
  %v27 = vadd.f32 %v26, 1.0
  %v28 = vmul.f32 %v27, %v21
  %v29 = vand.u32 2147483647, %v21
  %vm30 = vcmp.lt.f32.partialorder %v29, 0.0004427343
  %v31 = vsel %vm30, %v28, %v25
  %v32 = vadd.f32 %v22, 1.0
  %v33 = vlog2.pop %v32
  %v34 = vmul.f32 %v33, 0.6931472
  %v35 = vmul.f32 -0.5, %v22
  %v36 = vadd.f32 %v35, 1.0
  %v37 = vmul.f32 %v36, %v22
  %v38 = vand.u32 2147483647, %v22
  %vm39 = vcmp.lt.f32.partialorder %v38, 0.0004427343
  %v40 = vsel %vm39, %v37, %v34
  %v41 = vmax.f32 %v31, -100.0
  %v42 = vmax.f32 %v40, -100.0
  %v43 = vmul.f32 %v13, %v19
  %v44 = vmul.f32 %v14, %v20
  %v45 = vsub.f32 1.0, %v13
  %v46 = vsub.f32 1.0, %v14
  %v47 = vmul.f32 %v45, %v41
  %v48 = vmul.f32 %v46, %v42
  %v49 = vadd.f32 %v43, %v47
  %v50 = vadd.f32 %v44, %v48
  %v51 = vsub.f32 0.0, %v49
  %v52 = vsub.f32 0.0, %v50
  %v53 = vadd.f32 %v51, %v52
  %54 = vst [vmem:[%s2] sm:$0xff] %v53
  // Predicated region
  $region10: #{focal_loss.1} parent=0 // pred_check
    _
  $region11: #{focal_loss.1} parent=0 // pred_check_branch
    %56 = sbr.rel (0) target = $region13
  $region12: #{focal_loss.1} parent=0 // pred_region
    _
  $region13: #{focal_loss.1} parent=0 // pred_fallthru
    _
  // Predicated region
  $region14: #{focal_loss.1} parent=0 // pred_check
    _
  $region15: #{focal_loss.1} parent=0 // pred_check_branch
    %58 = sbr.rel (0) target = $region17
  $region16: #{focal_loss.1} parent=0 // pred_region
    _
  $region17: #{focal_loss.1} parent=0 // pred_fallthru
    _

</llo_original>
